<compile_context>
chip_gen: v6e
topology: v6e:2x2x1
jax: 0.10.0
libtpu: 0.0.40
codegen_flags: <defaults>
</compile_context>

<pallas_src>
import functools

import jax
import jax.numpy as jnp
from jax import lax
from jax.experimental import pallas as pl
from jax.experimental.pallas import tpu as pltpu


_SMALL_K_MAX = 16   # <=: remove-max loop, >: 31-bit radix select (re-tuned)


def _round_up(a: int, b: int) -> int:
    return ((a + b - 1) // b) * b


def _vmem_capacity_bytes() -> int:
    """Physical per-core VMEM; conservative 64 MiB (v7x) fallback."""
    try:
        info = pltpu.get_tpu_info()
        for attr in ("vmem_capacity_bytes", "vmem_size_bytes", "vmem_bytes"):
            v = getattr(info, attr, None)
            if v:
                return int(v)
    except Exception:
        pass
    return 64 * 1024 * 1024


# ------------------------------ in-kernel math ------------------------------

def _lane_count(pred, n_nodes):
    """Per-row count of True lanes.

    VPU-adds the 128-lane tiles together first, then does a single XLU
    lane-reduce, instead of one XLU reduce per (8,128) vreg.
    """
    v = pred.astype(jnp.int32)
    if n_nodes > 128 and n_nodes % 128 == 0:
        acc = v[:, 0:128]
        for j in range(1, n_nodes // 128):
            acc = acc + v[:, j * 128:(j + 1) * 128]
        v = acc
    return jnp.sum(v, axis=-1, keepdims=True)


def _kwta_small_k(x, col, k, n_nodes):
    """Threshold = k-th largest via (k-1) remove-the-current-max steps.

    Carries `masked` across iterations (no separate bool mask / recompute).
    """
    neg_inf = jnp.array(-jnp.inf, dtype=x.dtype)
    masked = x
    for _ in range(k - 1):
        row_max = jnp.max(masked, axis=-1, keepdims=True)
        is_max = masked == row_max
        # first occurrence of the current row max
        first_idx = jnp.min(
            jnp.where(is_max, col, jnp.int32(n_nodes)), axis=-1, keepdims=True)
        masked = jnp.where(col == first_idx, neg_inf, masked)
    thr = jnp.max(masked, axis=-1, keepdims=True)
    # NOTE: rows containing NaN diverge from lax.top_k (documented limitation).
    return jnp.where(x >= thr, x, jnp.zeros_like(x))


def _kwta_radix(x, k, n_nodes):
    """Threshold = k-th largest via 31-step bitwise bisection (k-independent)."""
    # Canonicalize -0.0 -> +0.0 so +/-0.0 ties match the `x >= thr` reference.
    xf = x.astype(jnp.float32) + jnp.float32(0.0)
    b = pltpu.bitcast(xf, jnp.int32)
    # Order-preserving int32 key: flip magnitude bits of negative floats so
    # signed integer ordering on `key` matches float ordering on `x`.
    key = jnp.bitwise_xor(
        b, jnp.bitwise_and(jnp.right_shift(b, 31), jnp.int32(0x7FFFFFFF)))

    rows = x.shape[0]
    kk = jnp.int32(k)
    thr = jnp.full((rows, 1), jnp.int32(-(2 ** 31)), dtype=jnp.int32)
    # sign bit first (candidate 0 in the signed sortable domain) ...
    cnt = _lane_count(key >= 0, n_nodes)
    thr = jnp.where(cnt >= kk, jnp.int32(0), thr)
    # ... then the remaining 31 bits, MSB -> LSB (one compare + one lane-tile
    # accumulate + one XLU reduce per bit; fixed cost regardless of k).
    for bit in range(30, -1, -1):
        cand = thr | jnp.int32(1 << bit)
        cnt = _lane_count(key >= cand, n_nodes)
        thr = jnp.where(cnt >= kk, cand, thr)
    # thr is the key of the k-th largest element; keep everything >= it.
    return jnp.where(key >= thr, x, jnp.zeros_like(x))


# --------------------------------- kernel -----------------------------------

def _kwta_kernel(x_ref, o_ref, *, k, n_nodes, n_chunks, row_chunk, small_k_max):
    use_small = (0 < k < n_nodes) and (k <= small_k_max)
    # column iota is only needed (and only kept live) on the small-k path
    col = (lax.broadcasted_iota(jnp.int32, (1, n_nodes), 1) if use_small else None)

    def process(xc):
        if k <= 0:
            return jnp.zeros_like(xc)
        if k >= n_nodes:
            return xc
        if use_small:
            return _kwta_small_k(xc, col, k, n_nodes)
        return _kwta_radix(xc, k, n_nodes)

    if n_chunks == 1:
        o_ref[...] = process(x_ref[...])
    else:
        # loop over row sub-chunks of the VMEM tile; unroll=2 interleaves two
        # independent threshold-selection chains (hides reduce latency) while
        # fori_loop keeps vreg live ranges bounded at chunk-pair boundaries.
        def body(c, carry):
            r0 = pl.multiple_of(c * row_chunk, row_chunk)
            o_ref[pl.ds(r0, row_chunk), :] = process(x_ref[pl.ds(r0, row_chunk), :])
            return carry

        lax.fori_loop(0, n_chunks, body, 0, unroll=2)


# --------------------------------- wrapper ----------------------------------

def hnet_kwta(x: jax.Array, n_winners: int, *, tile_rows: int | None = None,
              donate_input: bool = False) -> jax.Array:
    """k-winner-take-all over the last axis of x: (n_pts, n_nodes)."""
    n_pts, n_nodes = x.shape
    assert jnp.issubdtype(x.dtype, jnp.floating), "energies must be floating point"
    k = min(int(n_winners), n_nodes)
    itemsize = jnp.dtype(x.dtype).itemsize

    # dtype-dependent sublane multiple: f32 packs (8,128) vregs, 16-bit (16,128)
    sub = 8 if itemsize >= 4 else (16 if itemsize == 2 else 32)

    # Working-set-aware row chunk: the radix path keeps x, key and a per-bit
    # compare temp live for 31 serial steps (all f32 after upcast), so cap the
    # per-chunk element count at ~8K f32 elements (~8 vregs per live array);
    # halve the budget for sub-32-bit inputs (upcast doubles the footprint).
    elem_budget = 8192 if itemsize >= 4 else 4096
    row_chunk = max(sub, min(64, ((elem_budget // max(1, n_nodes)) // sub) * sub))

    vmem_cap = _vmem_capacity_bytes()
    small_vmem = vmem_cap < 96 * 1024 * 1024                 # v7x-class part
    per_buffer_budget = (8 if small_vmem else 16) * 1024 * 1024
    vmem_limit_cap = int(vmem_cap * 0.75)                    # leave headroom

    if tile_rows is None:
        max_rows = max(sub, (per_buffer_budget // max(1, n_nodes * itemsize))
                       // sub * sub)
        if n_pts <= max_rows:
            if n_pts <= 512:
                tile_rows = n_pts            # tiny input: one grid step is fine
            else:
                # mid-size input: >=4 grid steps so the parallel axis shards
                # across v7x's two TensorCores and DMA overlaps compute.
                tile_rows = min(max_rows, pl.cdiv(n_pts, 4))
        else:
            # big input: budget-limited tiles, >=8 steps for deep pipelining.
            tile_rows = max(sub, min(max_rows, pl.cdiv(n_pts, 8)))
    tile_rows = max(sub, _round_up(int(tile_rows), sub))

    # tile must be an integer number of row chunks
    if tile_rows < row_chunk:
        row_chunk = tile_rows
    elif tile_rows % row_chunk != 0:
        tile_rows = _round_up(tile_rows, row_chunk)
    n_chunks = tile_rows // row_chunk
    grid = pl.cdiv(n_pts, tile_rows)

    # Scoped VMEM: in + out, double-buffered, plus slack; capped well below
    # physical VMEM (>=25% headroom for compiler scratch / semaphores).
    tile_bytes = tile_rows * n_nodes * itemsize
    vmem_limit = int(min(vmem_limit_cap,
                         max(32 * 1024 * 1024, 4 * tile_bytes + (2 << 20))))

    kernel = functools.partial(_kwta_kernel, k=k, n_nodes=n_nodes,
                               n_chunks=n_chunks, row_chunk=row_chunk,
                               small_k_max=_SMALL_K_MAX)

    extra = {}
    if donate_input:
        # Output has identical shape/dtype; aliasing halves HBM footprint.
        extra["input_output_aliases"] = {0: 0}

    return pl.pallas_call(
        kernel,
        out_shape=jax.ShapeDtypeStruct((n_pts, n_nodes), x.dtype),
        grid=(grid,),
        in_specs=[pl.BlockSpec((tile_rows, n_nodes), lambda i: (i, 0))],
        out_specs=pl.BlockSpec((tile_rows, n_nodes), lambda i: (i, 0)),
        compiler_params=pltpu.CompilerParams(
            dimension_semantics=("parallel",),
            vmem_limit_bytes=vmem_limit),
        **extra,
    )(x)


# -------------------------------- reference ---------------------------------

def _kwta_reference(x: jax.Array, n_winners: int) -> jax.Array:
    """Pure-JAX reference: zero all but the top-k (threshold semantics)."""
    k = min(int(n_winners), x.shape[-1])
    topk_vals, _ = lax.top_k(x, k)
    thr = topk_vals[..., -1:]
    return jnp.where(x >= thr, x, jnp.zeros_like(x))


if __name__ == "__main__":
    key = jax.random.PRNGKey(0)
    k1, k2, k3 = jax.random.split(key, 3)

    # --- module configuration from the PyTorch spec: n_winners is the only param
    n_winners = 4
    n_pts, n_nodes = 16, 128
    x = jax.random.normal(k1, (n_pts, n_nodes), dtype=jnp.float32)

    out = jax.block_until_ready(hnet_kwta(x, n_winners))
    ref = _kwta_reference(x, n_winners)
    assert out.shape == (n_pts, n_nodes)
    assert jnp.array_equal(out, ref), "small-k path mismatch vs reference"
    assert int(jnp.sum(out != 0)) >= n_pts * n_winners

    # --- larger-k configuration exercises the radix-select path (with the
    #     lane-tile count), the in-tile chunk loop (n_chunks > 1, unroll=2),
    #     and a multi-step grid.
    n_winners2 = 20
    x2 = jax.random.normal(k2, (256, 256), dtype=jnp.float32)
    out2 = jax.block_until_ready(hnet_kwta(x2, n_winners2, tile_rows=128))
    ref2 = _kwta_reference(x2, n_winners2)
    assert jnp.array_equal(out2, ref2), "radix path mismatch vs reference"

    # --- bf16 configuration exercises the 16-row sublane rounding and the
    #     dtype-aware row-chunk budget.
    n_winners3 = 3
    x3 = jax.random.normal(k3, (32, 256), dtype=jnp.bfloat16)
    out3 = jax.block_until_ready(hnet_kwta(x3, n_winners3))
    ref3 = _kwta_reference(x3, n_winners3)
    assert jnp.array_equal(out3, ref3), "bf16 path mismatch vs reference"

    print("KERNEL_OK")
</pallas_src>

<mosaic_0001>
module attributes {stable_mosaic.version = 11 : i64} {
  func.func @_kwta_kernel(%arg0: i32, %arg1: memref<16x128xf32, #tpu.memory_space<vmem>>, %arg2: memref<16x128xf32, #tpu.memory_space<vmem>>) attributes {dimension_semantics = [#tpu.dimension_semantics<parallel>], iteration_bounds = array<i64: 1>, scalar_prefetch = 0 : i64, scratch_operands = 0 : i64, tpu.core_type = #tpu.core_type<tc>, window_params = [{transform_indices = @transform_0, window_bounds = array<i64: 16, 128>}, {transform_indices = @transform_1, window_bounds = array<i64: 16, 128>}]} {
    %0 = tpu.iota {dimensions = array<i32: 1>} : vector<1x128xi32>
    %c0 = arith.constant 0 : index
    %c0_0 = arith.constant 0 : index
    %1 = vector.load %arg1[%c0, %c0_0] : memref<16x128xf32, #tpu.memory_space<vmem>>, vector<16x128xf32>
    %cst = arith.constant dense<0xFF800000> : vector<16xf32>
    %2 = vector.multi_reduction <maximumf>, %1, %cst [1] : vector<16x128xf32> to vector<16xf32>
    %3 = vector.shape_cast %2 : vector<16xf32> to vector<16x1xf32>
    %4 = vector.broadcast %3 : vector<16x1xf32> to vector<16x128xf32>
    %5 = arith.cmpf oeq, %1, %4 : vector<16x128xf32>
    %c128_i32 = arith.constant 128 : i32
    %6 = vector.shape_cast %0 : vector<1x128xi32> to vector<1x128xi32>
    %7 = vector.broadcast %6 : vector<1x128xi32> to vector<16x128xi32>
    %8 = vector.broadcast %c128_i32 : i32 to vector<16x128xi32>
    %9 = arith.select %5, %7, %8 : vector<16x128xi1>, vector<16x128xi32>
    %cst_1 = arith.constant dense<2147483647> : vector<16xi32>
    %10 = vector.multi_reduction <minsi>, %9, %cst_1 [1] : vector<16x128xi32> to vector<16xi32>
    %11 = vector.shape_cast %10 : vector<16xi32> to vector<16x1xi32>
    %12 = vector.broadcast %0 : vector<1x128xi32> to vector<16x128xi32>
    %13 = vector.broadcast %11 : vector<16x1xi32> to vector<16x128xi32>
    %14 = arith.cmpi eq, %12, %13 : vector<16x128xi32>
    %cst_2 = arith.constant 0xFF800000 : f32
    %15 = vector.broadcast %cst_2 : f32 to vector<16x128xf32>
    %16 = arith.select %14, %15, %1 : vector<16x128xi1>, vector<16x128xf32>
    %cst_3 = arith.constant dense<0xFF800000> : vector<16xf32>
    %17 = vector.multi_reduction <maximumf>, %16, %cst_3 [1] : vector<16x128xf32> to vector<16xf32>
    %18 = vector.shape_cast %17 : vector<16xf32> to vector<16x1xf32>
    %19 = vector.broadcast %18 : vector<16x1xf32> to vector<16x128xf32>
    %20 = arith.cmpf oeq, %16, %19 : vector<16x128xf32>
    %c128_i32_4 = arith.constant 128 : i32
    %21 = vector.shape_cast %0 : vector<1x128xi32> to vector<1x128xi32>
    %22 = vector.broadcast %21 : vector<1x128xi32> to vector<16x128xi32>
    %23 = vector.broadcast %c128_i32_4 : i32 to vector<16x128xi32>
    %24 = arith.select %20, %22, %23 : vector<16x128xi1>, vector<16x128xi32>
    %cst_5 = arith.constant dense<2147483647> : vector<16xi32>
    %25 = vector.multi_reduction <minsi>, %24, %cst_5 [1] : vector<16x128xi32> to vector<16xi32>
    %26 = vector.shape_cast %25 : vector<16xi32> to vector<16x1xi32>
    %27 = vector.broadcast %0 : vector<1x128xi32> to vector<16x128xi32>
    %28 = vector.broadcast %26 : vector<16x1xi32> to vector<16x128xi32>
    %29 = arith.cmpi eq, %27, %28 : vector<16x128xi32>
    %cst_6 = arith.constant 0xFF800000 : f32
    %30 = vector.broadcast %cst_6 : f32 to vector<16x128xf32>
    %31 = arith.select %29, %30, %16 : vector<16x128xi1>, vector<16x128xf32>
    %cst_7 = arith.constant dense<0xFF800000> : vector<16xf32>
    %32 = vector.multi_reduction <maximumf>, %31, %cst_7 [1] : vector<16x128xf32> to vector<16xf32>
    %33 = vector.shape_cast %32 : vector<16xf32> to vector<16x1xf32>
    %34 = vector.broadcast %33 : vector<16x1xf32> to vector<16x128xf32>
    %35 = arith.cmpf oeq, %31, %34 : vector<16x128xf32>
    %c128_i32_8 = arith.constant 128 : i32
    %36 = vector.shape_cast %0 : vector<1x128xi32> to vector<1x128xi32>
    %37 = vector.broadcast %36 : vector<1x128xi32> to vector<16x128xi32>
    %38 = vector.broadcast %c128_i32_8 : i32 to vector<16x128xi32>
    %39 = arith.select %35, %37, %38 : vector<16x128xi1>, vector<16x128xi32>
    %cst_9 = arith.constant dense<2147483647> : vector<16xi32>
    %40 = vector.multi_reduction <minsi>, %39, %cst_9 [1] : vector<16x128xi32> to vector<16xi32>
    %41 = vector.shape_cast %40 : vector<16xi32> to vector<16x1xi32>
    %42 = vector.broadcast %0 : vector<1x128xi32> to vector<16x128xi32>
    %43 = vector.broadcast %41 : vector<16x1xi32> to vector<16x128xi32>
    %44 = arith.cmpi eq, %42, %43 : vector<16x128xi32>
    %cst_10 = arith.constant 0xFF800000 : f32
    %45 = vector.broadcast %cst_10 : f32 to vector<16x128xf32>
    %46 = arith.select %44, %45, %31 : vector<16x128xi1>, vector<16x128xf32>
    %cst_11 = arith.constant dense<0xFF800000> : vector<16xf32>
    %47 = vector.multi_reduction <maximumf>, %46, %cst_11 [1] : vector<16x128xf32> to vector<16xf32>
    %48 = vector.shape_cast %47 : vector<16xf32> to vector<16x1xf32>
    %49 = vector.broadcast %48 : vector<16x1xf32> to vector<16x128xf32>
    %50 = arith.cmpf oge, %1, %49 : vector<16x128xf32>
    %cst_12 = arith.constant 0.000000e+00 : f32
    %51 = vector.broadcast %cst_12 : f32 to vector<16x128xf32>
    %52 = arith.select %50, %1, %51 : vector<16x128xi1>, vector<16x128xf32>
    %c0_13 = arith.constant 0 : index
    %c0_14 = arith.constant 0 : index
    %53 = vector.load %arg2[%c0_13, %c0_14] : memref<16x128xf32, #tpu.memory_space<vmem>>, vector<16x128xf32>
    tpu.vector_store %arg2[%c0_13, %c0_14], %52 {strides = array<i32>} : memref<16x128xf32, #tpu.memory_space<vmem>>, vector<16x128xf32>,
    return
  }
  func.func @transform_0(%arg0: i32) -> (i32, i32) {
    %c0_i32 = arith.constant 0 : i32
    %c0_i32_0 = arith.constant 0 : i32
    return %arg0, %c0_i32 : i32, i32
  }
  func.func @transform_1(%arg0: i32) -> (i32, i32) {
    %c0_i32 = arith.constant 0 : i32
    %c0_i32_0 = arith.constant 0 : i32
    return %arg0, %c0_i32 : i32, i32
  }
}

</mosaic_0001>

<llo_original>
// kernel: tpu_custom_call.1
$region0: #{tpu_custom_call.1}
  #allocation0 [shape = 'u32[]', space=smem, size = 0x4, offset = 0x4, fixed_abs, tag = 'smem constant byte address 0x4 - core index']
  #allocation1 [shape = 'u32[144,128]{1,0:T(1,128)}', space=vmem, size = 0x12000, scoped, tag = 'internal scratch']
  %s0 = inlined_call_operand.hbm [shape: f32[16,128], index: 0, kind: input, shape index: {}]
  %s1 = inlined_call_operand.hbm [shape: f32[16,128], index: 1, kind: output, shape index: {}]
  %s2 = sld [smem:[#allocation0]]
  $region18: #{tpu_custom_call.1} parent=0
    _
  %s4 = ssub.s32 1, %s2
  %s5 = scalar_select 0, %s4, %s2
  $region1: #{tpu_custom_call.1} parent=0
    #allocation2 [shape = 'u8[8192]{0}', space=vmem, size = 0x2000, scoped, tag = 'input window, operand 0, single buffered']
    #allocation3 [shape = 's32[1]{0}', space=sflag, size = 0x4, scoped, tag = 'scoped memory for tpu_custom_call.1']
    #allocation4 [shape = 's32[1]{0}', space=sflag, size = 0x4, scoped, tag = 'scoped memory for tpu_custom_call.1']
    #allocation5 [shape = 'u8[8192]{0}', space=vmem, size = 0x2000, scoped, tag = 'output window, operand 0, single buffered']
    %6 = vsyncpa [#allocation3], 0
    %7 = vsyncpa [#allocation4], 0
    // Predicated region
    $region2: #{tpu_custom_call.1} parent=1 // pred_check
      _
    $region3: #{tpu_custom_call.1} parent=1 // pred_check_branch
      %9 = sbr.rel (0) target = $region5
    $region4: #{tpu_custom_call.1} parent=1 // pred_region
      %s11 = ssub.s32 256, 256
      %12 = vsyncadd [#allocation3], %s11
      %s13 = sshll.u32 [#allocation2], 4
      %s14 = int_to_ptr.vmem [resolvable:$true] %s13
      %19 = dma.hbm_to_vmem [thread:$0]  %s0, 256, %s14, [#allocation3], 128, 128, 8
    $region5: #{tpu_custom_call.1} parent=1 // pred_fallthru
      _
    // Predicated region
    $region6: #{tpu_custom_call.1} parent=1 // pred_check
      _
    $region7: #{tpu_custom_call.1} parent=1 // pred_check_branch
      %21 = sbr.rel (0) target = $region9
    $region8: #{tpu_custom_call.1} parent=1 // pred_region
      %22 = dma.done [#allocation3], 256
    $region9: #{tpu_custom_call.1} parent=1 // pred_fallthru
      _
    %v23 = vlaneseq
    %v24 = vand.u32 %v23, 127
    %v25 = vld [vmem:[#allocation2] sm:$0xff]
    %v26 = vld [vmem:[#allocation2 + $0x8] sm:$0xff]
    %27 = vmax.xlane.f32.xlu0 %v25
    %v28 = vpop.xlane.xlu0 %27
    %29 = vmax.xlane.f32.xlu0 %v26
    %v30 = vpop.xlane.xlu0 %29
    %vm31 = vcmp.eq.f32.partialorder %v25, %v28
    %vm32 = vcmp.eq.f32.partialorder %v26, %v30
    %v33 = vsel %vm31, %v24, 128
    %v34 = vsel %vm32, %v24, 128
    %v35 = vand.u32 %v33, 65535
    %v36 = vshra.s32 %v33, 16
    %v37 = vcvt.s32.f32 %v35
    %v38 = vcvt.s32.f32 %v36
    %39 = vmin.xlane.f32.xlu0 %v38
    %v40 = vpop.xlane.xlu0 %39
    %vm41 = vcmp.eq.f32.partialorder %v38, %v40
    %v42 = vsel %vm41, %v37, inf
    %43 = vmin.xlane.f32.xlu0 %v42
    %v44 = vpop.xlane.xlu0 %43
    %v45 = vcvt.f32.s32 %v44
    %v46 = vcvt.f32.s32 %v40
    %v47 = vshll.u32 %v46, 16
    %v48 = vadd.s32 %v47, %v45
    %v49 = vand.u32 %v34, 65535
    %v50 = vshra.s32 %v34, 16
    %v51 = vcvt.s32.f32 %v49
    %v52 = vcvt.s32.f32 %v50
    %53 = vmin.xlane.f32.xlu0 %v52
    %v54 = vpop.xlane.xlu0 %53
    %vm55 = vcmp.eq.f32.partialorder %v52, %v54
    %v56 = vsel %vm55, %v51, inf
    %57 = vmin.xlane.f32.xlu0 %v56
    %v58 = vpop.xlane.xlu0 %57
    %v59 = vcvt.f32.s32 %v58
    %v60 = vcvt.f32.s32 %v54
    %v61 = vshll.u32 %v60, 16
    %v62 = vadd.s32 %v61, %v59
    %vm63 = vcmp.eq.s32.totalorder %v24, %v48
    %vm64 = vcmp.eq.s32.totalorder %v24, %v62
    %v65 = vsel %vm63, -inf, %v25
    %v66 = vsel %vm64, -inf, %v26
    %67 = vmax.xlane.f32.xlu0 %v65
    %v68 = vpop.xlane.xlu0 %67
    %69 = vmax.xlane.f32.xlu0 %v66
    %v70 = vpop.xlane.xlu0 %69
    %vm71 = vcmp.eq.f32.partialorder %v65, %v68
    %vm72 = vcmp.eq.f32.partialorder %v66, %v70
    %v73 = vsel %vm71, %v24, 128
    %v74 = vsel %vm72, %v24, 128
    %v75 = vand.u32 %v73, 65535
    %v76 = vshra.s32 %v73, 16
    %v77 = vcvt.s32.f32 %v75
    %v78 = vcvt.s32.f32 %v76
    %79 = vmin.xlane.f32.xlu0 %v78
    %v80 = vpop.xlane.xlu0 %79
    %vm81 = vcmp.eq.f32.partialorder %v78, %v80
    %v82 = vsel %vm81, %v77, inf
    %83 = vmin.xlane.f32.xlu0 %v82
    %v84 = vpop.xlane.xlu0 %83
    %v85 = vcvt.f32.s32 %v84
    %v86 = vcvt.f32.s32 %v80
    %v87 = vshll.u32 %v86, 16
    %v88 = vadd.s32 %v87, %v85
    %v89 = vand.u32 %v74, 65535
    %v90 = vshra.s32 %v74, 16
    %v91 = vcvt.s32.f32 %v89
    %v92 = vcvt.s32.f32 %v90
    %93 = vmin.xlane.f32.xlu0 %v92
    %v94 = vpop.xlane.xlu0 %93
    %vm95 = vcmp.eq.f32.partialorder %v92, %v94
    %v96 = vsel %vm95, %v91, inf
    %97 = vmin.xlane.f32.xlu0 %v96
    %v98 = vpop.xlane.xlu0 %97
    %v99 = vcvt.f32.s32 %v98
    %v100 = vcvt.f32.s32 %v94
    %v101 = vshll.u32 %v100, 16
    %v102 = vadd.s32 %v101, %v99
    %vm103 = vcmp.eq.s32.totalorder %v24, %v88
    %vm104 = vcmp.eq.s32.totalorder %v24, %v102
    %v105 = vsel %vm103, -inf, %v65
    %v106 = vsel %vm104, -inf, %v66
    %107 = vmax.xlane.f32.xlu0 %v105
    %v108 = vpop.xlane.xlu0 %107
    %109 = vmax.xlane.f32.xlu0 %v106
    %v110 = vpop.xlane.xlu0 %109
    %vm111 = vcmp.eq.f32.partialorder %v105, %v108
    %vm112 = vcmp.eq.f32.partialorder %v106, %v110
    %v113 = vsel %vm111, %v24, 128
    %v114 = vsel %vm112, %v24, 128
    %v115 = vand.u32 %v113, 65535
    %v116 = vshra.s32 %v113, 16
    %v117 = vcvt.s32.f32 %v115
    %v118 = vcvt.s32.f32 %v116
    %119 = vmin.xlane.f32.xlu0 %v118
    %v120 = vpop.xlane.xlu0 %119
    %vm121 = vcmp.eq.f32.partialorder %v118, %v120
    %v122 = vsel %vm121, %v117, inf
    %123 = vmin.xlane.f32.xlu0 %v122
    %v124 = vpop.xlane.xlu0 %123
    %v125 = vcvt.f32.s32 %v124
    %v126 = vcvt.f32.s32 %v120
    %v127 = vshll.u32 %v126, 16
    %v128 = vadd.s32 %v127, %v125
    %v129 = vand.u32 %v114, 65535
    %v130 = vshra.s32 %v114, 16
    %v131 = vcvt.s32.f32 %v129
    %v132 = vcvt.s32.f32 %v130
    %133 = vmin.xlane.f32.xlu0 %v132
    %v134 = vpop.xlane.xlu0 %133
    %vm135 = vcmp.eq.f32.partialorder %v132, %v134
    %v136 = vsel %vm135, %v131, inf
    %137 = vmin.xlane.f32.xlu0 %v136
    %v138 = vpop.xlane.xlu0 %137
    %v139 = vcvt.f32.s32 %v138
    %v140 = vcvt.f32.s32 %v134
    %v141 = vshll.u32 %v140, 16
    %v142 = vadd.s32 %v141, %v139
    %vm143 = vcmp.eq.s32.totalorder %v24, %v128
    %vm144 = vcmp.eq.s32.totalorder %v24, %v142
    %v145 = vsel %vm143, -inf, %v105
    %v146 = vsel %vm144, -inf, %v106
    %147 = vmax.xlane.f32.xlu0 %v145
    %v148 = vpop.xlane.xlu0 %147
    %149 = vmax.xlane.f32.xlu0 %v146
    %v150 = vpop.xlane.xlu0 %149
    %vm151 = vcmp.ge.f32.partialorder %v25, %v148
    %vm152 = vcmp.ge.f32.partialorder %v26, %v150
    %v153 = vsel %vm151, %v25, 0.0
    %v154 = vsel %vm152, %v26, 0.0
    %155 = vst [vmem:[#allocation5] sm:$0xff] %v153
    %156 = vst [vmem:[#allocation5 + $0x8] sm:$0xff] %v154
    // Predicated region
    $region10: #{tpu_custom_call.1} parent=1 // pred_check
      _
    $region11: #{tpu_custom_call.1} parent=1 // pred_check_branch
      %158 = sbr.rel (0) target = $region13
    $region12: #{tpu_custom_call.1} parent=1 // pred_region
      %s160 = ssub.s32 256, 256
      %161 = vsyncadd [#allocation4], %s160
      %s162 = sshll.u32 [#allocation5], 4
      %s163 = int_to_ptr.vmem [resolvable:$true] %s162
      %168 = dma.vmem_to_hbm [thread:$0]  %s163, 256, %s1, [#allocation4], 128, 128, 8
    $region13: #{tpu_custom_call.1} parent=1 // pred_fallthru
      _
    // Predicated region
    $region14: #{tpu_custom_call.1} parent=1 // pred_check
      _
    $region15: #{tpu_custom_call.1} parent=1 // pred_check_branch
      %170 = sbr.rel (0) target = $region17
    $region16: #{tpu_custom_call.1} parent=1 // pred_region
      %171 = dma.done [#allocation4], 256
    $region17: #{tpu_custom_call.1} parent=1 // pred_fallthru
      _
    %172 = vsyncpa [#allocation3], 1
    %173 = vsyncpa [#allocation4], 1

</llo_original>
